<compile_context>
chip_gen: v5e
topology: v5e:2x2
jax: 0.10.0
libtpu: 0.0.40
codegen_flags: <defaults>
</compile_context>

<pallas_src>
import math

import jax
import jax.numpy as jnp
from jax import lax
from jax.experimental import pallas as pl
from jax.experimental.pallas import tpu as pltpu


def _round_up(x: int, m: int) -> int:
    return ((x + m - 1) // m) * m


def _cdiv(a: int, b: int) -> int:
    return (a + b - 1) // b


def _vmem_capacity_bytes() -> int:
    try:
        return int(pltpu.get_tpu_info().vmem_capacity_bytes)
    except Exception:
        return 64 * 1024 * 1024  # conservative (v7x-sized); v5e/v6e have 128 MiB


# ---------------------------------------------------------------------------
# Kernel 1: support = x_padded @ W_padded   (row-tiled, weight resident)
# ---------------------------------------------------------------------------
def _support_kernel(x_ref, w_ref, o_ref):
    o_ref[...] = jnp.dot(
        x_ref[...], w_ref[...], preferred_element_type=jnp.float32
    ).astype(o_ref.dtype)


# ---------------------------------------------------------------------------
# Kernel 2: out = leaky_relu((adj @ support) * inv_norm + bias)
#           grid = (row tiles, reduction tiles); reduction axis last.
# ---------------------------------------------------------------------------
def _make_adj_kernel(*, n, tk, cdt, has_norm, has_bias, negative_slope,
                     support_resident, acc_in_out, mask_k_tail):
    def kernel(*refs):
        # ref order: adj, support, [inv_norm], [bias], out, [acc scratch]
        adj_ref, sup_ref = refs[0], refs[1]
        idx = 2
        norm_ref = bias_ref = None
        if has_norm:
            norm_ref = refs[idx]
            idx += 1
        if has_bias:
            bias_ref = refs[idx]
            idx += 1
        o_ref = refs[idx]
        idx += 1
        acc_ref = o_ref if acc_in_out else refs[idx]

        k = pl.program_id(1)

        @pl.when(k == 0)
        def _():
            acc_ref[...] = jnp.zeros_like(acc_ref)

        adj_tile = adj_ref[...]
        if mask_k_tail:
            # Pallas edge blocks are not zero-filled: zero the ragged K tail.
            col = lax.broadcasted_iota(jnp.int32, adj_tile.shape, 1)
            adj_tile = jnp.where(k * tk + col < n, adj_tile, 0)
        adj_tile = adj_tile.astype(cdt)  # narrow cast on the (idle) VPU

        if support_resident:
            start = pl.multiple_of(k * tk, tk)
            sup_tile = sup_ref[pl.ds(start, tk), :]
        else:
            sup_tile = sup_ref[...]

        acc_ref[...] += jnp.dot(adj_tile, sup_tile,
                                preferred_element_type=jnp.float32)

        @pl.when(k == pl.num_programs(1) - 1)
        def _():
            out = acc_ref[...]
            if has_norm:
                out = out * norm_ref[...]       # inv_norm (exact 1/norm)
            if has_bias:
                out = out + bias_ref[...]
            out = jnp.where(out >= 0, out, negative_slope * out)
            o_ref[...] = out.astype(o_ref.dtype)

    return kernel


# ---------------------------------------------------------------------------
# Wrapper
# ---------------------------------------------------------------------------
def gcn_layer(x, adj, weight, bias=None, norm=None, *,
              negative_slope: float = 0.01,
              compute_dtype=jnp.bfloat16,
              tm: int = 1024, tk: int = 1024,
              support_resident=None):
    """Pallas implementation of GCNLayer.forward.

    x: (N, F_in), adj: (N, N) dense, weight: (F_in, F_out),
    bias: (F_out,) or None, norm: (N,)/(N,1) or None.

    compute_dtype is the MXU input dtype (bf16 default for speed; pass
    jnp.float32 for exact f32 numerics).  Accumulation is always f32.
    """
    N, f_in = x.shape
    f_in_w, f_out = weight.shape
    assert f_in == f_in_w
    assert adj.shape == (N, N)

    out_dtype = jnp.dtype(x.dtype)
    cdt = jnp.dtype(compute_dtype)
    has_norm = norm is not None
    has_bias = bias is not None
    acc_in_out = out_dtype == jnp.dtype(jnp.float32)

    # Lane-dense output width (128-multiple) -> unmasked stores, full MXU cols.
    f_out_pad = _round_up(f_out, 128)

    # 128-aligned tiles, clamped for small problems.
    tm = max(128, min(tm, _round_up(N, 128)))
    tk = max(128, min(tk, _round_up(N, 128)))

    cap = _vmem_capacity_bytes()
    budget = int(0.60 * cap)   # working-set target for the main kernel
    vmem_cap = int(0.75 * cap)  # scoped-VMEM ceiling handed to the compiler

    adj_bytes = jnp.dtype(adj.dtype).itemsize
    out_bytes = out_dtype.itemsize
    n_adj_bufs = 3              # we request Buffered(3) on the adj stream

    def _resident(tk_):
        if support_resident is not None:
            return bool(support_resident)
        n_sup = _cdiv(N, tk_) * tk_
        return 2 * n_sup * f_out_pad * cdt.itemsize <= budget // 3

    def _footprint(tm_, tk_, res_):
        n_sup = _cdiv(N, tk_) * tk_
        sup = (2 * n_sup * f_out_pad * cdt.itemsize if res_
               else 2 * tk_ * f_out_pad * cdt.itemsize)
        return (n_adj_bufs * tm_ * tk_ * adj_bytes
                + sup
                + 2 * tm_ * f_out_pad * out_bytes
                + (0 if acc_in_out else tm_ * f_out_pad * 4)
                + 2 * (tm_ + f_out_pad) * 4)

    resident = _resident(tk)
    while _footprint(tm, tk, resident) > budget and (tm > 128 or tk > 128):
        if tk >= tm and tk > 128:
            tk = max(128, tk // 2)
        else:
            tm = max(128, tm // 2)
        resident = _resident(tk)
    est = _footprint(tm, tk, resident)

    grid_m = _cdiv(N, tm)
    grid_k = _cdiv(N, tk)
    n_sup_rows = grid_k * tk
    mask_k_tail = (N % tk) != 0

    # ---- support = x @ W (computed once; rows zero-padded to the K extent so
    #      the adj ragged tail multiplies zeros; stored in compute dtype) ----
    x_p = jnp.zeros((n_sup_rows, f_in), cdt).at[:N, :].set(x.astype(cdt))
    w_p = jnp.zeros((f_in, f_out_pad), cdt).at[:, :f_out].set(weight.astype(cdt))

    def _sup_fp(t):
        return (2 * t * f_in * cdt.itemsize
                + 2 * f_in * f_out_pad * cdt.itemsize
                + 2 * t * f_out_pad * cdt.itemsize)

    tsup = tk
    while _sup_fp(tsup) > budget and tsup >= 256:
        tsup //= 2   # stays a divisor of tk (exact blocks) and a multiple of 8

    support = pl.pallas_call(
        _support_kernel,
        out_shape=jax.ShapeDtypeStruct((n_sup_rows, f_out_pad), cdt),
        grid_spec=pltpu.PrefetchScalarGridSpec(
            num_scalar_prefetch=0,
            grid=(n_sup_rows // tsup,),
            in_specs=[
                pl.BlockSpec((tsup, f_in), lambda i: (i, 0)),
                pl.BlockSpec((f_in, f_out_pad), lambda i: (0, 0)),
            ],
            out_specs=pl.BlockSpec((tsup, f_out_pad), lambda i: (i, 0)),
        ),
        compiler_params=pltpu.CompilerParams(
            dimension_semantics=("parallel",),
            vmem_limit_bytes=int(min(vmem_cap,
                                     max(32 << 20, _sup_fp(tsup) + (8 << 20))))),
    )(x_p, w_p)

    # ---- out = adj @ support with fused epilogue; adj streamed raw from HBM ----
    in_args = [adj, support]
    extra_specs = []
    if has_norm:
        inv_norm = (1.0 / jnp.asarray(norm, jnp.float32)).reshape(N, 1)
        in_args.append(inv_norm)
        extra_specs.append(pl.BlockSpec((tm, 1), lambda i, k: (i, 0)))
    if has_bias:
        bias_p = jnp.zeros((1, f_out_pad), jnp.float32).at[0, :f_out].set(
            jnp.asarray(bias, jnp.float32).reshape(f_out))
        in_args.append(bias_p)
        extra_specs.append(pl.BlockSpec((1, f_out_pad), lambda i, k: (0, 0)))

    if resident:
        sup_spec = pl.BlockSpec((n_sup_rows, f_out_pad), lambda i, k: (0, 0))
    else:
        sup_spec = pl.BlockSpec((tk, f_out_pad), lambda i, k: (k, 0))

    kernel = _make_adj_kernel(
        n=N, tk=tk, cdt=cdt, has_norm=has_norm, has_bias=has_bias,
        negative_slope=negative_slope, support_resident=resident,
        acc_in_out=acc_in_out, mask_k_tail=mask_k_tail)

    scratch = [] if acc_in_out else [pltpu.VMEM((tm, f_out_pad), jnp.float32)]
    vmem_limit = int(min(vmem_cap, max(32 << 20, est + (8 << 20))))

    cost = pl.CostEstimate(
        flops=2 * N * N * f_out_pad,
        transcendentals=0,
        bytes_accessed=(N * N * adj_bytes
                        + n_sup_rows * f_out_pad * cdt.itemsize
                        + N * f_out_pad * out_bytes),
    )

    def _call(adj_pipeline_mode):
        if adj_pipeline_mode is None:
            adj_spec = pl.BlockSpec((tm, tk), lambda i, k: (i, k))
        else:
            adj_spec = pl.BlockSpec((tm, tk), lambda i, k: (i, k),
                                    pipeline_mode=adj_pipeline_mode)
        return pl.pallas_call(
            kernel,
            out_shape=jax.ShapeDtypeStruct((N, f_out_pad), out_dtype),
            grid_spec=pltpu.PrefetchScalarGridSpec(
                num_scalar_prefetch=0,
                grid=(grid_m, grid_k),          # reduction axis last
                in_specs=[adj_spec, sup_spec] + extra_specs,
                out_specs=pl.BlockSpec((tm, f_out_pad), lambda i, k: (i, 0)),
                scratch_shapes=scratch,
            ),
            compiler_params=pltpu.CompilerParams(
                dimension_semantics=("parallel", "arbitrary"),
                vmem_limit_bytes=vmem_limit),
            cost_estimate=cost,
        )(*in_args)

    if hasattr(pl, "Buffered"):
        try:
            out_p = _call(pl.Buffered(3))   # keep adj HBM requests back-to-back
        except Exception:
            out_p = _call(None)
    else:
        out_p = _call(None)

    return out_p[:, :f_out]


# ---------------------------------------------------------------------------
# Pure-JAX reference (matches the PyTorch forward)
# ---------------------------------------------------------------------------
def _reference(x, adj, weight, bias=None, norm=None, negative_slope=0.01):
    support = x @ weight
    out = adj @ support
    if norm is not None:
        out = out / norm
    if bias is not None:
        out = out + bias
    return jnp.where(out >= 0, out, negative_slope * out)


if __name__ == "__main__":
    N, F_IN, F_OUT = 128, 64, 32

    key = jax.random.PRNGKey(0)
    k_x, k_adj, k_w, k_b, k_n = jax.random.split(key, 5)

    x = jax.random.normal(k_x, (N, F_IN), dtype=jnp.float32)

    # Row-normalized dense adjacency (torch.spmm == dense matmul numerically).
    a_raw = (jax.random.uniform(k_adj, (N, N)) < 0.1).astype(jnp.float32)
    adj = a_raw + a_raw.T + jnp.eye(N, dtype=jnp.float32)
    adj = adj / jnp.sum(adj, axis=1, keepdims=True)

    # xavier_uniform_-style init for (F_IN, F_OUT).
    bound = math.sqrt(6.0 / (F_IN + F_OUT))
    weight = jax.random.uniform(k_w, (F_IN, F_OUT), dtype=jnp.float32,
                                minval=-bound, maxval=bound)
    stdv = 1.0 / math.sqrt(F_OUT)
    bias = jax.random.uniform(k_b, (F_OUT,), dtype=jnp.float32,
                              minval=-stdv, maxval=stdv)
    norm = jax.random.uniform(k_n, (N, 1), dtype=jnp.float32,
                              minval=0.5, maxval=2.0)

    # --- Case 1: module defaults (bias=False, norm=None), exact f32 path ---
    out1 = jax.block_until_ready(
        gcn_layer(x, adj, weight, compute_dtype=jnp.float32))
    ref1 = _reference(x, adj, weight)
    assert out1.shape == (N, F_OUT)
    err1 = float(jnp.max(jnp.abs(out1 - ref1)))
    assert jnp.allclose(out1, ref1, atol=1e-4, rtol=1e-4), f"f32 max abs err {err1}"

    # --- Case 2: bf16 compute path with bias + norm (fast config) ---
    out2 = jax.block_until_ready(
        gcn_layer(x, adj, weight, bias=bias, norm=norm,
                  compute_dtype=jnp.bfloat16))
    x_b = x.astype(jnp.bfloat16).astype(jnp.float32)
    adj_b = adj.astype(jnp.bfloat16).astype(jnp.float32)
    w_b = weight.astype(jnp.bfloat16).astype(jnp.float32)
    ref2 = _reference(x_b, adj_b, w_b, bias=bias, norm=norm)
    err2 = float(jnp.max(jnp.abs(out2 - ref2)))
    assert out2.shape == (N, F_OUT)
    assert jnp.allclose(out2, ref2, atol=1e-2, rtol=1e-2), f"bf16 max abs err {err2}"

    # --- Case 3: ragged N (not a tile multiple), multi-step reduction,
    #             streamed-support path, exact f32 compute ---
    N3, F_IN3, F_OUT3 = 300, 48, 40
    k3 = jax.random.split(jax.random.PRNGKey(0), 5)
    x3 = jax.random.normal(k3[0], (N3, F_IN3), dtype=jnp.float32)
    a3 = (jax.random.uniform(k3[1], (N3, N3)) < 0.1).astype(jnp.float32)
    adj3 = a3 + a3.T + jnp.eye(N3, dtype=jnp.float32)
    adj3 = adj3 / jnp.sum(adj3, axis=1, keepdims=True)
    w3 = jax.random.uniform(k3[2], (F_IN3, F_OUT3), dtype=jnp.float32,
                            minval=-0.2, maxval=0.2)
    b3 = jax.random.uniform(k3[3], (F_OUT3,), dtype=jnp.float32,
                            minval=-0.1, maxval=0.1)
    n3 = jax.random.uniform(k3[4], (N3, 1), dtype=jnp.float32,
                            minval=0.5, maxval=2.0)

    out3 = jax.block_until_ready(
        gcn_layer(x3, adj3, w3, bias=b3, norm=n3, compute_dtype=jnp.float32,
                  tm=256, tk=128, support_resident=False))
    ref3 = _reference(x3, adj3, w3, bias=b3, norm=n3)
    err3 = float(jnp.max(jnp.abs(out3 - ref3)))
    assert out3.shape == (N3, F_OUT3)
    assert jnp.allclose(out3, ref3, atol=2e-4, rtol=2e-4), \
        f"ragged f32 max abs err {err3}"

    print("KERNEL_OK")
</pallas_src>

<mosaic_0001>
module attributes {stable_mosaic.version = 11 : i64} {
  func.func @_support_kernel(%arg0: i32, %arg1: memref<128x64xf32, #tpu.memory_space<vmem>>, %arg2: memref<64x128xf32, #tpu.memory_space<vmem>>, %arg3: memref<128x128xf32, #tpu.memory_space<vmem>>) attributes {dimension_semantics = [#tpu.dimension_semantics<parallel>], iteration_bounds = array<i64: 1>, scalar_prefetch = 0 : i64, scratch_operands = 0 : i64, tpu.core_type = #tpu.core_type<tc>, window_params = [{transform_indices = @transform_0, window_bounds = array<i64: 128, 64>}, {pipeline_mode = #tpu.pipeline_mode<synchronous>, transform_indices = @transform_1, window_bounds = array<i64: 64, 128>}, {transform_indices = @transform_2, window_bounds = array<i64: 128, 128>}]} {
    %c0 = arith.constant 0 : index
    %c0_0 = arith.constant 0 : index
    %0 = vector.load %arg1[%c0, %c0_0] : memref<128x64xf32, #tpu.memory_space<vmem>>, vector<128x64xf32>
    %c0_1 = arith.constant 0 : index
    %c0_2 = arith.constant 0 : index
    %1 = vector.load %arg2[%c0_1, %c0_2] : memref<64x128xf32, #tpu.memory_space<vmem>>, vector<64x128xf32>
    %cst = arith.constant dense<0.000000e+00> : vector<128x128xf32>
    %2 = tpu.matmul %0, %1, %cst {dimension_numbers = #tpu.dot_dimension_numbers<[1], [0], [0], [1], [0, 0, 1, 1], [], []>} : vector<128x64xf32>, vector<64x128xf32>, vector<128x128xf32> -> vector<128x128xf32>
    %c0_3 = arith.constant 0 : index
    %c0_4 = arith.constant 0 : index
    %3 = vector.load %arg3[%c0_3, %c0_4] : memref<128x128xf32, #tpu.memory_space<vmem>>, vector<128x128xf32>
    tpu.vector_store %arg3[%c0_3, %c0_4], %2 {strides = array<i32>} : memref<128x128xf32, #tpu.memory_space<vmem>>, vector<128x128xf32>,
    return
  }
  func.func @transform_0(%arg0: i32) -> (i32, i32) {
    %c0_i32 = arith.constant 0 : i32
    %c0_i32_0 = arith.constant 0 : i32
    return %arg0, %c0_i32 : i32, i32
  }
  func.func @transform_1(%arg0: i32) -> (i32, i32) {
    %c0_i32 = arith.constant 0 : i32
    %c0_i32_0 = arith.constant 0 : i32
    %c0_i32_1 = arith.constant 0 : i32
    return %c0_i32, %c0_i32_0 : i32, i32
  }
  func.func @transform_2(%arg0: i32) -> (i32, i32) {
    %c0_i32 = arith.constant 0 : i32
    %c0_i32_0 = arith.constant 0 : i32
    return %arg0, %c0_i32 : i32, i32
  }
}

</mosaic_0001>

<llo_original>
// kernel: tpu_custom_call.1
$region0: #{tpu_custom_call.1}
  #allocation0 [shape = 'u32[]', space=smem, size = 0x4, offset = 0x4, fixed_abs, tag = 'smem constant byte address 0x4 - core index']
  #allocation1 [shape = 'u32[72,128]{1,0:T(1,128)}', space=vmem, size = 0x9000, scoped, tag = 'internal scratch']
  %s0 = inlined_call_operand.vmem [shape: f32[128,64], index: 0, kind: input, shape index: {}]
  %s1 = inlined_call_operand.vmem [shape: f32[64,128], index: 1, kind: input, shape index: {}]
  %s2 = inlined_call_operand.hbm [shape: f32[128,128], index: 2, kind: output, shape index: {}]
  %s3 = sld [smem:[#allocation0]]
  $region18: #{tpu_custom_call.1} parent=0
    _
  %s5 = ssub.s32 1, %s3
  %s6 = scalar_select 0, %s5, %s3
  $region1: #{tpu_custom_call.1} parent=0
    #allocation2 [shape = 'u8[65536]{0}', space=vmem, size = 0x10000, scoped, tag = 'output window, operand 0, single buffered']
    #allocation3 [shape = 's32[1]{0}', space=sflag, size = 0x4, scoped, tag = 'scoped memory for tpu_custom_call.1']
    %7 = vsyncpa [#allocation3], 0
    // Predicated region
    $region2: #{tpu_custom_call.1} parent=1 // pred_check
      _
    $region3: #{tpu_custom_call.1} parent=1 // pred_check_branch
      %9 = sbr.rel (0) target = $region5
    $region4: #{tpu_custom_call.1} parent=1 // pred_region
      _
    $region5: #{tpu_custom_call.1} parent=1 // pred_fallthru
      _
    // Predicated region
    $region6: #{tpu_custom_call.1} parent=1 // pred_check
      _
    $region7: #{tpu_custom_call.1} parent=1 // pred_check_branch
      %11 = sbr.rel (0) target = $region9
    $region8: #{tpu_custom_call.1} parent=1 // pred_region
      _
    $region9: #{tpu_custom_call.1} parent=1 // pred_fallthru
      _
    %v12 = vld [vmem:[%s0] sm:$0xff]
    %v13 = vld [vmem:[%s0 + $0x8] sm:$0xff]
    %v14 = vld [vmem:[%s0 + $0x10] sm:$0xff]
    %v15 = vld [vmem:[%s0 + $0x18] sm:$0xff]
    %v16 = vld [vmem:[%s0 + $0x20] sm:$0xff]
    %v17 = vld [vmem:[%s0 + $0x28] sm:$0xff]
    %v18 = vld [vmem:[%s0 + $0x30] sm:$0xff]
    %v19 = vld [vmem:[%s0 + $0x38] sm:$0xff]
    %v20 = vld [vmem:[%s0 + $0x40] sm:$0xff]
    %v21 = vld [vmem:[%s0 + $0x48] sm:$0xff]
    %v22 = vld [vmem:[%s0 + $0x50] sm:$0xff]
    %v23 = vld [vmem:[%s0 + $0x58] sm:$0xff]
    %v24 = vld [vmem:[%s0 + $0x60] sm:$0xff]
    %v25 = vld [vmem:[%s0 + $0x68] sm:$0xff]
    %v26 = vld [vmem:[%s0 + $0x70] sm:$0xff]
    %v27 = vld [vmem:[%s0 + $0x78] sm:$0xff]
    %v28 = vld [vmem:[%s1] sm:$0xff]
    %v29 = vld [vmem:[%s1 + $0x8] sm:$0xff]
    %v30 = vld [vmem:[%s1 + $0x10] sm:$0xff]
    %v31 = vld [vmem:[%s1 + $0x18] sm:$0xff]
    %v32 = vld [vmem:[%s1 + $0x20] sm:$0xff]
    %v33 = vld [vmem:[%s1 + $0x28] sm:$0xff]
    %v34 = vld [vmem:[%s1 + $0x30] sm:$0xff]
    %v35 = vld [vmem:[%s1 + $0x38] sm:$0xff]
    %vm36 = vcmask 523264
    %v38 = vsel %vm36, %v12, 0
    %v41 = vsel %vm36, %v13, 0
    %v44 = vsel %vm36, %v14, 0
    %v47 = vsel %vm36, %v15, 0
    %v50 = vsel %vm36, %v16, 0
    %v53 = vsel %vm36, %v17, 0
    %v56 = vsel %vm36, %v18, 0
    %v59 = vsel %vm36, %v19, 0
    %v62 = vsel %vm36, %v20, 0
    %v65 = vsel %vm36, %v21, 0
    %v68 = vsel %vm36, %v22, 0
    %v71 = vsel %vm36, %v23, 0
    %v74 = vsel %vm36, %v24, 0
    %v77 = vsel %vm36, %v25, 0
    %v80 = vsel %vm36, %v26, 0
    %v83 = vsel %vm36, %v27, 0
    %85 = vmatpush.msra.mxu0 0.0
    %86 = vmatpush.msra.mxu0 0.0
    %87 = vmatpush.msra.mxu0 0.0
    %88 = vmatpush.msra.mxu0 0.0
    %89 = vmatpush.msra.mxu0 0.0
    %90 = vmatpush.msra.mxu0 0.0
    %91 = vmatpush.msra.mxu0 0.0
    %92 = vmatpush.msra.mxu0 0.0
    %93 = vmatpush.msra.mxu0 %v35
    %94 = vmatpush.msra.mxu0 %v34
    %95 = vmatpush.msra.mxu0 %v33
    %96 = vmatpush.msra.mxu0 %v32
    %97 = vmatpush.msra.mxu0 %v31
    %98 = vmatpush.msra.mxu0 %v30
    %99 = vmatpush.msra.mxu0 %v29
    %100 = vmatpush.msra.mxu0 %v28
    %101 = vmatmul.f32.gmra.mxu0 %v38
    %v102 = vpop.f32.mrf.mxu0
    %v103 = vadd.f32 0.0, %v102
    %104 = vmatmul.f32.gmra.mxu0 %v41
    %v105 = vpop.f32.mrf.mxu0
    %v106 = vadd.f32 0.0, %v105
    %107 = vmatmul.f32.gmra.mxu0 %v44
    %v108 = vpop.f32.mrf.mxu0
    %v109 = vadd.f32 0.0, %v108
    %110 = vmatmul.f32.gmra.mxu0 %v47
    %v111 = vpop.f32.mrf.mxu0
    %v112 = vadd.f32 0.0, %v111
    %113 = vmatmul.f32.gmra.mxu0 %v50
    %v114 = vpop.f32.mrf.mxu0
    %v115 = vadd.f32 0.0, %v114
    %116 = vmatmul.f32.gmra.mxu0 %v53
    %v117 = vpop.f32.mrf.mxu0
    %v118 = vadd.f32 0.0, %v117
    %119 = vmatmul.f32.gmra.mxu0 %v56
    %v120 = vpop.f32.mrf.mxu0
    %v121 = vadd.f32 0.0, %v120
    %122 = vmatmul.f32.gmra.mxu0 %v59
    %v123 = vpop.f32.mrf.mxu0
    %v124 = vadd.f32 0.0, %v123
    %125 = vmatmul.f32.gmra.mxu0 %v62
    %v126 = vpop.f32.mrf.mxu0
    %v127 = vadd.f32 0.0, %v126
    %128 = vmatmul.f32.gmra.mxu0 %v65
    %v129 = vpop.f32.mrf.mxu0
    %v130 = vadd.f32 0.0, %v129
    %131 = vmatmul.f32.gmra.mxu0 %v68
    %v132 = vpop.f32.mrf.mxu0
    %v133 = vadd.f32 0.0, %v132
    %134 = vmatmul.f32.gmra.mxu0 %v71
    %v135 = vpop.f32.mrf.mxu0
    %v136 = vadd.f32 0.0, %v135
    %137 = vmatmul.f32.gmra.mxu0 %v74
    %v138 = vpop.f32.mrf.mxu0
    %v139 = vadd.f32 0.0, %v138
    %140 = vmatmul.f32.gmra.mxu0 %v77
    %v141 = vpop.f32.mrf.mxu0
    %v142 = vadd.f32 0.0, %v141
    %143 = vmatmul.f32.gmra.mxu0 %v80
    %v144 = vpop.f32.mrf.mxu0
    %v145 = vadd.f32 0.0, %v144
    %146 = vmatmul.f32.gmra.mxu0 %v83
    %v147 = vpop.f32.mrf.mxu0
    %v148 = vadd.f32 0.0, %v147
    %149 = vdwg.mxu0
    %150 = vst [vmem:[#allocation2] sm:$0xff] %v103
    %151 = vst [vmem:[#allocation2 + $0x8] sm:$0xff] %v106
    %152 = vst [vmem:[#allocation2 + $0x10] sm:$0xff] %v109
    %153 = vst [vmem:[#allocation2 + $0x18] sm:$0xff] %v112
    %154 = vst [vmem:[#allocation2 + $0x20] sm:$0xff] %v115
    %155 = vst [vmem:[#allocation2 + $0x28] sm:$0xff] %v118
    %156 = vst [vmem:[#allocation2 + $0x30] sm:$0xff] %v121
    %157 = vst [vmem:[#allocation2 + $0x38] sm:$0xff] %v124
    %158 = vst [vmem:[#allocation2 + $0x40] sm:$0xff] %v127
    %159 = vst [vmem:[#allocation2 + $0x48] sm:$0xff] %v130
    %160 = vst [vmem:[#allocation2 + $0x50] sm:$0xff] %v133
    %161 = vst [vmem:[#allocation2 + $0x58] sm:$0xff] %v136
    %162 = vst [vmem:[#allocation2 + $0x60] sm:$0xff] %v139
    %163 = vst [vmem:[#allocation2 + $0x68] sm:$0xff] %v142
    %164 = vst [vmem:[#allocation2 + $0x70] sm:$0xff] %v145
    %165 = vst [vmem:[#allocation2 + $0x78] sm:$0xff] %v148
    // Predicated region
    $region10: #{tpu_custom_call.1} parent=1 // pred_check
      _
    $region11: #{tpu_custom_call.1} parent=1 // pred_check_branch
      %167 = sbr.rel (0) target = $region13
    $region12: #{tpu_custom_call.1} parent=1 // pred_region
      %169 = vsyncadd [#allocation3], 0
      %s170 = sshll.u32 [#allocation2], 4
      %s171 = int_to_ptr.vmem [resolvable:$true] %s170
      %s172 = sshll.u32 %s2, 4
      %s173 = int_to_ptr.hbm [resolvable:$true] %s172
      %178 = dma.vmem_to_hbm [thread:$0]  %s171, 2048, %s173, [#allocation3], 128, 128, 8
    $region13: #{tpu_custom_call.1} parent=1 // pred_fallthru
      _
    // Predicated region
    $region14: #{tpu_custom_call.1} parent=1 // pred_check
      _
    $region15: #{tpu_custom_call.1} parent=1 // pred_check_branch
      %180 = sbr.rel (0) target = $region17
    $region16: #{tpu_custom_call.1} parent=1 // pred_region
      %182 = dma.done [#allocation3], 2048
    $region17: #{tpu_custom_call.1} parent=1 // pred_fallthru
      _
    %183 = vsyncpa [#allocation3], 1

</llo_original>
